<compile_context>
chip_gen: v7x
topology: tpu7x:2x2x1
jax: 0.10.0
libtpu: 0.0.40
codegen_flags: <defaults>
</compile_context>

<pallas_src>
import functools

import jax
import jax.numpy as jnp
from jax.experimental import pallas as pl
from jax.experimental.pallas import tpu as pltpu

BN_EPS = 1e-5
LANE = 128
SUBLANE = 8


# ----------------------------------------------------------------------------
# Kernels
# ----------------------------------------------------------------------------
def _actor_fused_kernel(s_ref, w1_ref, w2_ref, wp_ref, vec_ref, out_ref):
    """Whole-batch fused forward (BN stats computed in-kernel)."""
    hidden = w1_ref.shape[1]
    padded_out = out_ref.shape[1]
    mm_dtype = w1_ref.dtype   # f32 or bf16 (wrapper pre-cast weights + state)

    # Packed row-vectors: 0=b1, 1=gamma, 2=beta, 3=b2, 4=bp(padded).
    b1 = vec_ref[0:1, :hidden]
    gamma = vec_ref[1:2, :hidden]
    beta = vec_ref[2:3, :hidden]
    b2 = vec_ref[3:4, :hidden]
    bp = vec_ref[4:5, :padded_out]

    # fc[0]: Linear + ReLU  (f32 accumulation on the MXU)
    h1 = jnp.dot(s_ref[...], w1_ref[...],
                 preferred_element_type=jnp.float32) + b1
    h1 = jnp.maximum(h1, 0.0)

    # fc[2]: BatchNorm1d, training mode. Single-pass biased batch stats
    # (var = E[x^2] - mean^2), folded into one FMA: hn = h1*scale + shift.
    inv_b = 1.0 / h1.shape[0]
    mean = jnp.sum(h1, axis=0, keepdims=True) * inv_b
    msq = jnp.sum(h1 * h1, axis=0, keepdims=True) * inv_b
    var = jnp.maximum(msq - mean * mean, 0.0)
    scale = gamma * jax.lax.rsqrt(var + BN_EPS)
    shift = beta - mean * scale
    hn = h1 * scale + shift

    # fc[3]: Linear + ReLU
    h2 = jnp.dot(hn.astype(mm_dtype), w2_ref[...],
                 preferred_element_type=jnp.float32) + b2
    h2 = jnp.maximum(h2, 0.0)

    # Fused placing heads: Linear + ReLU (padded cols have zero w/b -> ReLU 0).
    o = jnp.dot(h2.astype(mm_dtype), wp_ref[...],
                preferred_element_type=jnp.float32) + bp
    out_ref[...] = jnp.maximum(o, 0.0)


def _actor_tiled_kernel(s_ref, w1_ref, w2_ref, wp_ref, vec_ref, ss_ref, out_ref):
    """Batch-tiled forward; BN scale/shift were hoisted and arrive in ss_ref."""
    hidden = w1_ref.shape[1]
    padded_out = out_ref.shape[1]
    mm_dtype = w1_ref.dtype

    b1 = vec_ref[0:1, :hidden]
    b2 = vec_ref[3:4, :hidden]
    bp = vec_ref[4:5, :padded_out]
    scale = ss_ref[0:1, :]
    shift = ss_ref[1:2, :]

    h1 = jnp.dot(s_ref[...], w1_ref[...],
                 preferred_element_type=jnp.float32) + b1
    h1 = jnp.maximum(h1, 0.0)
    hn = h1 * scale + shift

    h2 = jnp.dot(hn.astype(mm_dtype), w2_ref[...],
                 preferred_element_type=jnp.float32) + b2
    h2 = jnp.maximum(h2, 0.0)

    o = jnp.dot(h2.astype(mm_dtype), wp_ref[...],
                preferred_element_type=jnp.float32) + bp
    out_ref[...] = jnp.maximum(o, 0.0)


# ----------------------------------------------------------------------------
# Helpers
# ----------------------------------------------------------------------------
def _round_up(x, m):
    return (x + m - 1) // m * m


def _vreg_padded_bytes(shape, dtype):
    itemsize = jnp.dtype(dtype).itemsize
    if len(shape) == 0:
        return itemsize
    shape = (1,) + tuple(shape) if len(shape) == 1 else tuple(shape)
    lead = 1
    for d in shape[:-2]:
        lead *= d
    return lead * _round_up(shape[-2], SUBLANE) * _round_up(shape[-1], LANE) * itemsize


def _derive_vmem_limit(shape_dtypes):
    """Right-size vmem_limit_bytes from actual (block) shapes + headroom."""
    need = sum(_vreg_padded_bytes(s, d) for s, d in shape_dtypes)
    # 2x for double-buffering, + headroom for compiler-internal scratch.
    return int(min(96 * 1024 * 1024, max(16 * 1024 * 1024, 2 * need + 4 * 1024 * 1024)))


def _pick_batch_tile(b):
    """Batch-row tile for the grid path; None -> single fused block."""
    if b < 512:
        return None
    for bt in (2048, 1024, 512, 256):
        if b % bt == 0 and b // bt >= 2:
            return bt
    # TODO(synk): pad the batch up to a tile multiple instead of falling back.
    return None


def prepare_params(params, action_dim, use_bf16=False):
    """One-time weight prep: pad + fuse heads, pack row-vectors, (optionally)
    cast matmul operands to bf16. Do NOT call per forward step.

    Note: bf16 only pays off once B >= ~16 and hidden/K >= ~128; at tiny
    shapes it adds cast work and half-empty (16,128) tiles (net loss).
    """
    n_heads, head_dim = action_dim
    out_dim = n_heads * head_dim
    padded_out = _round_up(out_dim, LANE)
    hidden = params["w1"].shape[1]
    width = max(hidden, padded_out)
    mm_dtype = jnp.bfloat16 if use_bf16 else jnp.float32

    wp, bp = params["wp"], params["bp"]
    pad_cols = padded_out - out_dim
    if pad_cols:
        wp = jnp.pad(wp, ((0, 0), (0, pad_cols)))
        bp = jnp.pad(bp, ((0, 0), (0, pad_cols)))

    def row(v):
        v = v.astype(jnp.float32)
        return jnp.pad(v, ((0, 0), (0, width - v.shape[1])))

    # rows: 0=b1, 1=gamma, 2=beta, 3=b2, 4=bp(padded)
    vec = jnp.concatenate(
        [row(params["b1"]), row(params["gamma"]), row(params["beta"]),
         row(params["b2"]), row(bp)], axis=0)

    return {
        "w1": params["w1"].astype(mm_dtype),
        "w2": params["w2"].astype(mm_dtype),
        "wp": wp.astype(mm_dtype),
        "vec": vec,
        # kept unpacked (f32) for the JAX-side BN-stat hoist on the tiled path
        "b1": params["b1"].astype(jnp.float32),
        "gamma": params["gamma"].astype(jnp.float32),
        "beta": params["beta"].astype(jnp.float32),
    }


# ----------------------------------------------------------------------------
# Forward
# ----------------------------------------------------------------------------
@functools.partial(jax.jit, static_argnames=("action_dim", "return_padded"))
def actor_forward(state, prep, action_dim, return_padded=False):
    """state: (B, state_dim) -> (B, n_heads, head_dim), or the lane-dense
    padded (B, padded_out) slab when return_padded=True (skips the slice copy).
    `prep` must come from prepare_params (no per-call pad/cast)."""
    b, state_dim = state.shape
    n_heads, head_dim = action_dim
    out_dim = n_heads * head_dim

    w1, w2, wp, vec = prep["w1"], prep["w2"], prep["wp"], prep["vec"]
    hidden = w1.shape[1]
    padded_out = wp.shape[1]
    mm_dtype = w1.dtype
    # Pre-cast state in the wrapper (no-op for f32) instead of inside kernel.
    x = state.astype(mm_dtype)

    bt = _pick_batch_tile(b)

    if bt is None:
        # Small / launch-bound: one fused whole-batch block, in-kernel BN stats.
        vmem_limit = _derive_vmem_limit([
            (x.shape, x.dtype), (w1.shape, w1.dtype), (w2.shape, w2.dtype),
            (wp.shape, wp.dtype), (vec.shape, vec.dtype),
            ((b, padded_out), jnp.float32),
        ])
        vspec = pl.BlockSpec(memory_space=pltpu.VMEM)
        out = pl.pallas_call(
            _actor_fused_kernel,
            out_shape=jax.ShapeDtypeStruct((b, padded_out), jnp.float32),
            in_specs=[vspec] * 5,
            out_specs=vspec,
            compiler_params=pltpu.CompilerParams(vmem_limit_bytes=vmem_limit),
        )(x, w1, w2, wp, vec)
    else:
        # Large batch: hoist BN stats (tiny JAX-side sum/sumsq of h1), then run
        # the main kernel on a 'parallel' batch grid (uses both TCs on v7x).
        h1 = jnp.maximum(
            jnp.dot(x, w1, preferred_element_type=jnp.float32) + prep["b1"], 0.0)
        mean = jnp.mean(h1, axis=0, keepdims=True)
        msq = jnp.mean(h1 * h1, axis=0, keepdims=True)
        var = jnp.maximum(msq - mean * mean, 0.0)
        scale = prep["gamma"] * jax.lax.rsqrt(var + BN_EPS)
        shift = prep["beta"] - mean * scale
        ss = jnp.concatenate([scale, shift], axis=0)          # (2, hidden) f32

        vmem_limit = _derive_vmem_limit([
            ((bt, state_dim), x.dtype), (w1.shape, w1.dtype),
            (w2.shape, w2.dtype), (wp.shape, wp.dtype),
            (vec.shape, vec.dtype), (ss.shape, ss.dtype),
            ((bt, padded_out), jnp.float32),
        ])
        out = pl.pallas_call(
            _actor_tiled_kernel,
            out_shape=jax.ShapeDtypeStruct((b, padded_out), jnp.float32),
            grid=(b // bt,),
            in_specs=[
                pl.BlockSpec((bt, state_dim), lambda i: (i, 0)),
                pl.BlockSpec(w1.shape, lambda i: (0, 0)),
                pl.BlockSpec(w2.shape, lambda i: (0, 0)),
                pl.BlockSpec(wp.shape, lambda i: (0, 0)),
                pl.BlockSpec(vec.shape, lambda i: (0, 0)),
                pl.BlockSpec(ss.shape, lambda i: (0, 0)),
            ],
            out_specs=pl.BlockSpec((bt, padded_out), lambda i: (i, 0)),
            compiler_params=pltpu.CompilerParams(
                dimension_semantics=("parallel",),
                vmem_limit_bytes=vmem_limit),
        )(x, w1, w2, wp, vec, ss)

    if return_padded:
        return out
    # stack(dim=-2) of per-head outputs == reshape of the (sliced) fused output
    return out[:, :out_dim].reshape(b, n_heads, head_dim)


# ----------------------------------------------------------------------------
# Init + reference
# ----------------------------------------------------------------------------
def init_params(key, state_dim, hidden_dim, action_dim):
    """Deterministic init mimicking torch.nn.Linear default U[-1/sqrt(fan_in), +]."""
    n_heads, head_dim = action_dim
    ks = jax.random.split(key, 6)

    def lin(kw, kb, fan_in, fan_out):
        bound = 1.0 / jnp.sqrt(jnp.float32(fan_in))
        w = jax.random.uniform(kw, (fan_in, fan_out), jnp.float32, -bound, bound)
        b = jax.random.uniform(kb, (1, fan_out), jnp.float32, -bound, bound)
        return w, b

    w1, b1 = lin(ks[0], ks[1], state_dim, hidden_dim)
    w2, b2 = lin(ks[2], ks[3], hidden_dim, hidden_dim)
    bound = 1.0 / jnp.sqrt(jnp.float32(hidden_dim))
    wp = jax.random.uniform(ks[4], (hidden_dim, n_heads * head_dim),
                            jnp.float32, -bound, bound)
    bp = jax.random.uniform(ks[5], (1, n_heads * head_dim),
                            jnp.float32, -bound, bound)
    return {
        "w1": w1, "b1": b1,
        "gamma": jnp.ones((1, hidden_dim), jnp.float32),
        "beta": jnp.zeros((1, hidden_dim), jnp.float32),
        "w2": w2, "b2": b2,
        "wp": wp, "bp": bp,
    }


def actor_forward_ref(state, params, action_dim):
    """Pure-JAX f32 reference (training-mode BN, two-pass variance)."""
    n_heads, head_dim = action_dim
    h1 = jnp.maximum(state @ params["w1"] + params["b1"], 0.0)
    mean = jnp.mean(h1, axis=0, keepdims=True)
    var = jnp.mean((h1 - mean) ** 2, axis=0, keepdims=True)
    hn = (h1 - mean) / jnp.sqrt(var + BN_EPS) * params["gamma"] + params["beta"]
    h2 = jnp.maximum(hn @ params["w2"] + params["b2"], 0.0)
    o = jnp.maximum(h2 @ params["wp"] + params["bp"], 0.0)
    return o.reshape(state.shape[0], n_heads, head_dim)


# ----------------------------------------------------------------------------
if __name__ == "__main__":
    state_dim = 16
    hidden_dim = 32
    action_dim = (4, 8)          # (n placing heads, per-head action size)

    key = jax.random.PRNGKey(0)
    k_params, k_small, k_large = jax.random.split(key, 3)
    params = init_params(k_params, state_dim, hidden_dim, action_dim)

    # One-time weight prep (hoisted out of the per-step path).
    prep_f32 = prepare_params(params, action_dim, use_bf16=False)
    prep_bf16 = prepare_params(params, action_dim, use_bf16=True)

    # --- small batch: fused whole-batch kernel (in-kernel BN stats) ----------
    batch_small = 8
    state_small = jax.random.normal(k_small, (batch_small, state_dim), jnp.float32)
    ref_small = actor_forward_ref(state_small, params, action_dim)
    out_small = jax.block_until_ready(
        actor_forward(state_small, prep_f32, action_dim))
    assert out_small.shape == (batch_small, action_dim[0], action_dim[1]), out_small.shape
    assert jnp.allclose(out_small, ref_small, atol=1e-4, rtol=1e-4), \
        "small-batch f32 mismatch vs. JAX reference"

    # --- large batch: BN-stat hoist + 'parallel' batch grid ------------------
    batch_large = 1024
    state_large = jax.random.normal(k_large, (batch_large, state_dim), jnp.float32)
    ref_large = actor_forward_ref(state_large, params, action_dim)
    out_large = jax.block_until_ready(
        actor_forward(state_large, prep_f32, action_dim))
    assert out_large.shape == (batch_large, action_dim[0], action_dim[1]), out_large.shape
    assert jnp.allclose(out_large, ref_large, atol=1e-4, rtol=1e-4), \
        "tiled f32 mismatch vs. JAX reference"

    # padded (lane-dense) output path: no post-kernel slice/reshape copy
    out_padded = jax.block_until_ready(
        actor_forward(state_large, prep_f32, action_dim, return_padded=True))
    assert out_padded.shape[1] % LANE == 0
    assert jnp.allclose(
        out_padded[:, :action_dim[0] * action_dim[1]].reshape(ref_large.shape),
        ref_large, atol=1e-4, rtol=1e-4), "padded-output mismatch"

    # bf16 matmul operands (f32 accumulation) on the large/tiled path only;
    # at small shapes bf16 is a net loss, so it stays opt-in. Loose tolerance:
    # bf16 operand rounding gets amplified by BatchNorm.
    out_bf16 = jax.block_until_ready(
        actor_forward(state_large, prep_bf16, action_dim))
    assert out_bf16.shape == (batch_large, action_dim[0], action_dim[1]), out_bf16.shape
    assert jnp.allclose(out_bf16, ref_large, atol=2e-1, rtol=2e-1), \
        "bf16 mismatch vs. JAX reference"

    print("KERNEL_OK")
</pallas_src>

<mosaic_0001>
module attributes {stable_mosaic.version = 11 : i64} {
  func.func @_actor_fused_kernel(%arg0: memref<8x16xf32, #tpu.memory_space<vmem>>, %arg1: memref<16x32xf32, #tpu.memory_space<vmem>>, %arg2: memref<32x32xf32, #tpu.memory_space<vmem>>, %arg3: memref<32x128xf32, #tpu.memory_space<vmem>>, %arg4: memref<5x128xf32, #tpu.memory_space<vmem>>, %arg5: memref<8x128xf32, #tpu.memory_space<vmem>>) attributes {dimension_semantics = [], scalar_prefetch = 0 : i64, scratch_operands = 0 : i64, tpu.core_type = #tpu.core_type<tc>} {
    %c0 = arith.constant 0 : index
    %c0_0 = arith.constant 0 : index
    %0 = vector.load %arg4[%c0, %c0_0] : memref<5x128xf32, #tpu.memory_space<vmem>>, vector<1x32xf32>
    %c1 = arith.constant 1 : index
    %c0_1 = arith.constant 0 : index
    %1 = vector.load %arg4[%c1, %c0_1] : memref<5x128xf32, #tpu.memory_space<vmem>>, vector<1x32xf32>
    %c2 = arith.constant 2 : index
    %c0_2 = arith.constant 0 : index
    %2 = vector.load %arg4[%c2, %c0_2] : memref<5x128xf32, #tpu.memory_space<vmem>>, vector<1x32xf32>
    %c3 = arith.constant 3 : index
    %c0_3 = arith.constant 0 : index
    %3 = vector.load %arg4[%c3, %c0_3] : memref<5x128xf32, #tpu.memory_space<vmem>>, vector<1x32xf32>
    %c4 = arith.constant 4 : index
    %c0_4 = arith.constant 0 : index
    %4 = vector.load %arg4[%c4, %c0_4] : memref<5x128xf32, #tpu.memory_space<vmem>>, vector<1x128xf32>
    %c0_5 = arith.constant 0 : index
    %c0_6 = arith.constant 0 : index
    %5 = vector.load %arg0[%c0_5, %c0_6] : memref<8x16xf32, #tpu.memory_space<vmem>>, vector<8x16xf32>
    %c0_7 = arith.constant 0 : index
    %c0_8 = arith.constant 0 : index
    %6 = vector.load %arg1[%c0_7, %c0_8] : memref<16x32xf32, #tpu.memory_space<vmem>>, vector<16x32xf32>
    %cst = arith.constant dense<0.000000e+00> : vector<8x32xf32>
    %7 = tpu.matmul %5, %6, %cst {dimension_numbers = #tpu.dot_dimension_numbers<[1], [0], [0], [1], [0, 0, 1, 1], [], []>} : vector<8x16xf32>, vector<16x32xf32>, vector<8x32xf32> -> vector<8x32xf32>
    %8 = vector.broadcast %0 : vector<1x32xf32> to vector<8x32xf32>
    %9 = arith.addf %7, %8 : vector<8x32xf32>
    %cst_9 = arith.constant 0.000000e+00 : f32
    %10 = vector.broadcast %cst_9 : f32 to vector<8x32xf32>
    %11 = arith.maximumf %9, %10 : vector<8x32xf32>
    %cst_10 = arith.constant dense<0.000000e+00> : vector<32xf32>
    %12 = vector.multi_reduction <add>, %11, %cst_10 [0] : vector<8x32xf32> to vector<32xf32>
    %13 = vector.shape_cast %12 : vector<32xf32> to vector<1x32xf32>
    %cst_11 = arith.constant 1.250000e-01 : f32
    %14 = vector.broadcast %cst_11 : f32 to vector<1x32xf32>
    %15 = arith.mulf %13, %14 : vector<1x32xf32>
    %16 = arith.mulf %11, %11 : vector<8x32xf32>
    %cst_12 = arith.constant dense<0.000000e+00> : vector<32xf32>
    %17 = vector.multi_reduction <add>, %16, %cst_12 [0] : vector<8x32xf32> to vector<32xf32>
    %18 = vector.shape_cast %17 : vector<32xf32> to vector<1x32xf32>
    %cst_13 = arith.constant 1.250000e-01 : f32
    %19 = vector.broadcast %cst_13 : f32 to vector<1x32xf32>
    %20 = arith.mulf %18, %19 : vector<1x32xf32>
    %21 = arith.mulf %15, %15 : vector<1x32xf32>
    %22 = arith.subf %20, %21 : vector<1x32xf32>
    %cst_14 = arith.constant 0.000000e+00 : f32
    %23 = vector.broadcast %cst_14 : f32 to vector<1x32xf32>
    %24 = arith.maximumf %22, %23 : vector<1x32xf32>
    %cst_15 = arith.constant 9.99999974E-6 : f32
    %25 = vector.broadcast %cst_15 : f32 to vector<1x32xf32>
    %26 = arith.addf %24, %25 : vector<1x32xf32>
    %27 = math.rsqrt %26 : vector<1x32xf32>
    %28 = arith.mulf %1, %27 : vector<1x32xf32>
    %29 = arith.mulf %15, %28 : vector<1x32xf32>
    %30 = arith.subf %2, %29 : vector<1x32xf32>
    %31 = vector.broadcast %28 : vector<1x32xf32> to vector<8x32xf32>
    %32 = arith.mulf %11, %31 : vector<8x32xf32>
    %33 = vector.broadcast %30 : vector<1x32xf32> to vector<8x32xf32>
    %34 = arith.addf %32, %33 : vector<8x32xf32>
    %c0_16 = arith.constant 0 : index
    %c0_17 = arith.constant 0 : index
    %35 = vector.load %arg2[%c0_16, %c0_17] : memref<32x32xf32, #tpu.memory_space<vmem>>, vector<32x32xf32>
    %cst_18 = arith.constant dense<0.000000e+00> : vector<8x32xf32>
    %36 = tpu.matmul %34, %35, %cst_18 {dimension_numbers = #tpu.dot_dimension_numbers<[1], [0], [0], [1], [0, 0, 1, 1], [], []>} : vector<8x32xf32>, vector<32x32xf32>, vector<8x32xf32> -> vector<8x32xf32>
    %37 = vector.broadcast %3 : vector<1x32xf32> to vector<8x32xf32>
    %38 = arith.addf %36, %37 : vector<8x32xf32>
    %cst_19 = arith.constant 0.000000e+00 : f32
    %39 = vector.broadcast %cst_19 : f32 to vector<8x32xf32>
    %40 = arith.maximumf %38, %39 : vector<8x32xf32>
    %c0_20 = arith.constant 0 : index
    %c0_21 = arith.constant 0 : index
    %41 = vector.load %arg3[%c0_20, %c0_21] : memref<32x128xf32, #tpu.memory_space<vmem>>, vector<32x128xf32>
    %cst_22 = arith.constant dense<0.000000e+00> : vector<8x128xf32>
    %42 = tpu.matmul %40, %41, %cst_22 {dimension_numbers = #tpu.dot_dimension_numbers<[1], [0], [0], [1], [0, 0, 1, 1], [], []>} : vector<8x32xf32>, vector<32x128xf32>, vector<8x128xf32> -> vector<8x128xf32>
    %43 = vector.broadcast %4 : vector<1x128xf32> to vector<8x128xf32>
    %44 = arith.addf %42, %43 : vector<8x128xf32>
    %cst_23 = arith.constant 0.000000e+00 : f32
    %45 = vector.broadcast %cst_23 : f32 to vector<8x128xf32>
    %46 = arith.maximumf %44, %45 : vector<8x128xf32>
    %c0_24 = arith.constant 0 : index
    %c0_25 = arith.constant 0 : index
    %47 = vector.load %arg5[%c0_24, %c0_25] : memref<8x128xf32, #tpu.memory_space<vmem>>, vector<8x128xf32>
    tpu.vector_store %arg5[%c0_24, %c0_25], %46 {strides = array<i32>} : memref<8x128xf32, #tpu.memory_space<vmem>>, vector<8x128xf32>,
    return
  }
}

</mosaic_0001>

<llo_original>
// kernel: actor_forward.1
$region0: #{actor_forward.1}
  #allocation0 [shape = 'u32[]', space=smem, size = 0x4, offset = 0x4, fixed_abs, tag = 'smem constant byte address 0x4 - core index']
  #allocation1 [shape = 'u32[144,128]{1,0:T(1,128)}', space=vmem, size = 0x12000, scoped, tag = 'internal scratch']
  %s0 = inlined_call_operand.hbm [shape: f32[8,16], index: 0, kind: input, shape index: {}]
  %s1 = inlined_call_operand.hbm [shape: f32[16,32], index: 1, kind: input, shape index: {}]
  %s2 = inlined_call_operand.hbm [shape: f32[32,32], index: 2, kind: input, shape index: {}]
  %s3 = inlined_call_operand.hbm [shape: f32[32,128], index: 3, kind: input, shape index: {}]
  %s4 = inlined_call_operand.hbm [shape: f32[5,128], index: 4, kind: input, shape index: {}]
  %s5 = inlined_call_operand.vmem [shape: f32[8,128], index: 5, kind: output, shape index: {}]
  %s6 = sld [smem:[#allocation0]]
  $region50: #{actor_forward.1} parent=0
    _
  %s8 = ssub.s32 1, %s6
  %s9 = scalar_select 0, %s8, %s6
  $region1: #{actor_forward.1} parent=0
    #allocation2 [shape = 'u8[4096]{0}', space=vmem, size = 0x1000, scoped, tag = 'input window, operand 0, single buffered']
    #allocation3 [shape = 's32[1]{0}', space=sflag, size = 0x4, scoped, tag = 'scoped memory for actor_forward.1']
    #allocation4 [shape = 'u8[8192]{0}', space=vmem, size = 0x2000, scoped, tag = 'input window, operand 1, single buffered']
    #allocation5 [shape = 's32[1]{0}', space=sflag, size = 0x4, scoped, tag = 'scoped memory for actor_forward.1']
    #allocation6 [shape = 'u8[16384]{0}', space=vmem, size = 0x4000, scoped, tag = 'input window, operand 2, single buffered']
    #allocation7 [shape = 'u8[16384]{0}', space=vmem, size = 0x4000, scoped, tag = 'input window, operand 3, single buffered']
    #allocation8 [shape = 's32[1]{0}', space=sflag, size = 0x4, scoped, tag = 'scoped memory for actor_forward.1']
    #allocation9 [shape = 'u8[4096]{0}', space=vmem, size = 0x1000, scoped, tag = 'input window, operand 4, single buffered']
    %10 = vsyncpa [#allocation3], 0
    %11 = vsyncpa [#allocation5], 0
    %12 = vsyncpa [#allocation8], 0
    // Predicated region
    $region2: #{actor_forward.1} parent=1 // pred_check
      _
    $region3: #{actor_forward.1} parent=1 // pred_check_branch
      %14 = sbr.rel (0) target = $region5
    $region4: #{actor_forward.1} parent=1 // pred_region
      %s16 = ssub.s32 128, 128
      %17 = vsyncadd [#allocation3], %s16
      %s19 = sshll.u32 [#allocation2], 4
      %s20 = int_to_ptr.vmem [resolvable:$true] %s19
      %22 = dma.hbm_to_vmem [thread:$0]  %s0, 128, %s20, [#allocation3]
    $region5: #{actor_forward.1} parent=1 // pred_fallthru
      _
    // Predicated region
    $region6: #{actor_forward.1} parent=1 // pred_check
      _
    $region7: #{actor_forward.1} parent=1 // pred_check_branch
      %24 = sbr.rel (0) target = $region9
    $region8: #{actor_forward.1} parent=1 // pred_region
      %s26 = ssub.s32 256, 256
      %27 = vsyncadd [#allocation5], %s26
      %s28 = sshll.u32 [#allocation4], 4
      %s29 = int_to_ptr.vmem [resolvable:$true] %s28
      %34 = dma.hbm_to_vmem [thread:$0]  %s1, 256, %s29, [#allocation5], 128, 128, 8
    $region9: #{actor_forward.1} parent=1 // pred_fallthru
      _
    // Predicated region
    $region10: #{actor_forward.1} parent=1 // pred_check
      _
    $region11: #{actor_forward.1} parent=1 // pred_check_branch
      %36 = sbr.rel (0) target = $region13
    $region12: #{actor_forward.1} parent=1 // pred_region
      %s38 = ssub.s32 512, 512
      %39 = vsyncadd [#allocation5], %s38
      %s40 = sshll.u32 [#allocation6], 4
      %s41 = int_to_ptr.vmem [resolvable:$true] %s40
      %46 = dma.hbm_to_vmem [thread:$0]  %s2, 512, %s41, [#allocation5], 128, 128, 8
    $region13: #{actor_forward.1} parent=1 // pred_fallthru
      _
    // Predicated region
    $region14: #{actor_forward.1} parent=1 // pred_check
      _
    $region15: #{actor_forward.1} parent=1 // pred_check_branch
      %48 = sbr.rel (0) target = $region17
    $region16: #{actor_forward.1} parent=1 // pred_region
      %s50 = ssub.s32 512, 512
      %51 = vsyncadd [#allocation8], %s50
      %s52 = sshll.u32 [#allocation7], 4
      %s53 = int_to_ptr.vmem [resolvable:$true] %s52
      %58 = dma.hbm_to_vmem [thread:$0]  %s3, 512, %s53, [#allocation8], 128, 128, 8
    $region17: #{actor_forward.1} parent=1 // pred_fallthru
      _
    // Predicated region
    $region18: #{actor_forward.1} parent=1 // pred_check
      _
    $region19: #{actor_forward.1} parent=1 // pred_check_branch
      %60 = sbr.rel (0) target = $region21
    $region20: #{actor_forward.1} parent=1 // pred_region
      %s62 = ssub.s32 128, 128
      %63 = vsyncadd [#allocation8], %s62
      %s65 = sshll.u32 [#allocation9], 4
      %s66 = int_to_ptr.vmem [resolvable:$true] %s65
      %68 = dma.hbm_to_vmem [thread:$0]  %s4, 128, %s66, [#allocation8]
    $region21: #{actor_forward.1} parent=1 // pred_fallthru
      _
    // Predicated region
    $region22: #{actor_forward.1} parent=1 // pred_check
      _
    $region23: #{actor_forward.1} parent=1 // pred_check_branch
      %70 = sbr.rel (0) target = $region25
    $region24: #{actor_forward.1} parent=1 // pred_region
      %71 = dma.done [#allocation3], 128
    $region25: #{actor_forward.1} parent=1 // pred_fallthru
      _
    // Predicated region
    $region26: #{actor_forward.1} parent=1 // pred_check
      _
    $region27: #{actor_forward.1} parent=1 // pred_check_branch
      %73 = sbr.rel (0) target = $region29
    $region28: #{actor_forward.1} parent=1 // pred_region
      %74 = dma.done [#allocation5], 256
    $region29: #{actor_forward.1} parent=1 // pred_fallthru
      _
    // Predicated region
    $region30: #{actor_forward.1} parent=1 // pred_check
      _
    $region31: #{actor_forward.1} parent=1 // pred_check_branch
      %76 = sbr.rel (0) target = $region33
    $region32: #{actor_forward.1} parent=1 // pred_region
      %77 = dma.done [#allocation5], 512
    $region33: #{actor_forward.1} parent=1 // pred_fallthru
      _
    // Predicated region
    $region34: #{actor_forward.1} parent=1 // pred_check
      _
    $region35: #{actor_forward.1} parent=1 // pred_check_branch
      %79 = sbr.rel (0) target = $region37
    $region36: #{actor_forward.1} parent=1 // pred_region
      %80 = dma.done [#allocation8], 512
    $region37: #{actor_forward.1} parent=1 // pred_fallthru
      _
    // Predicated region
    $region38: #{actor_forward.1} parent=1 // pred_check
      _
    $region39: #{actor_forward.1} parent=1 // pred_check_branch
      %82 = sbr.rel (0) target = $region41
    $region40: #{actor_forward.1} parent=1 // pred_region
      %83 = dma.done [#allocation8], 128
    $region41: #{actor_forward.1} parent=1 // pred_fallthru
      _
    %v84 = vld [vmem:[#allocation9] sm:$0x1]
    %v85 = vld [vmem:[#allocation9 + $0x1] sm:$0x1]
    %v86 = vld [vmem:[#allocation9 + $0x2] sm:$0x1]
    %v87 = vld [vmem:[#allocation9 + $0x3] sm:$0x1]
    %v88 = vld [vmem:[#allocation9 + $0x4] sm:$0x1]
    %v89 = vld [vmem:[#allocation2] sm:$0xff]
    %v90 = vld [vmem:[#allocation4] sm:$0xff]
    %v91 = vld [vmem:[#allocation4 + $0x8] sm:$0xff]
    %v92 = vlaneseq
    %v93 = vshrl.u32 %v92, 7
    %v94 = vsub.s32 0, %v93
    %v95 = vrot.slane %v84, %v94
    %vm96 = vcmask 130048
    %v98 = vsel %vm96, %v89, 0
    %100 = vmatprep.subr.mxu0 0.0
    %101 = vmatpush1.msra.mxu0 %v90
    %102 = vmatprep.subr.mxu0 0.0
    %103 = vmatpush1.msra.mxu0 %v91
    %104 = vmatprep.subr.mxu0 0.0
    %105 = vmatpush1.msra.mxu0 0.0
    %106 = vmatprep.subr.mxu0 0.0
    %107 = vmatpush1.msra.mxu0 0.0
    %108 = vmatprep.subr.mxu0 0.0
    %109 = vmatpush1.msra.mxu0 0.0
    %110 = vmatprep.subr.mxu0 0.0
    %111 = vmatpush1.msra.mxu0 0.0
    %112 = vmatprep.subr.mxu0 0.0
    %113 = vmatpush1.msra.mxu0 0.0
    %114 = vmatprep.subr.mxu0 0.0
    %115 = vmatpush1.msra.mxu0 0.0
    %116 = vmatprep.subr.mxu0 0.0
    %117 = vmatpush1.msra.mxu0 0.0
    %118 = vmatprep.subr.mxu0 0.0
    %119 = vmatpush1.msra.mxu0 0.0
    %120 = vmatprep.subr.mxu0 0.0
    %121 = vmatpush1.msra.mxu0 0.0
    %122 = vmatprep.subr.mxu0 0.0
    %123 = vmatpush1.msra.mxu0 0.0
    %124 = vmatprep.subr.mxu0 0.0
    %125 = vmatpush1.msra.mxu0 0.0
    %126 = vmatprep.subr.mxu0 0.0
    %127 = vmatpush1.msra.mxu0 0.0
    %128 = vmatprep.subr.mxu0 0.0
    %129 = vmatpush1.msra.mxu0 0.0
    %130 = vmatprep.subr.mxu0 0.0
    %131 = vmatpush1.msra.mxu0 0.0
    %132 = vmatprep.subr.mxu0 0.0
    %133 = vmatpush1.msra.mxu0 0.0
    %134 = vmatprep.subr.mxu0 0.0
    %135 = vmatpush1.msra.mxu0 0.0
    %136 = vmatprep.subr.mxu0 0.0
    %137 = vmatpush1.msra.mxu0 0.0
    %138 = vmatprep.subr.mxu0 0.0
    %139 = vmatpush1.msra.mxu0 0.0
    %140 = vmatprep.subr.mxu0 0.0
    %141 = vmatpush1.msra.mxu0 0.0
    %142 = vmatprep.subr.mxu0 0.0
    %143 = vmatpush1.msra.mxu0 0.0
    %144 = vmatprep.subr.mxu0 0.0
    %145 = vmatpush1.msra.mxu0 0.0
    %146 = vmatprep.subr.mxu0 0.0
    %147 = vmatpush1.msra.mxu0 0.0
    %148 = vmatprep.subr.mxu0 0.0
    %149 = vmatpush1.msra.mxu0 0.0
    %150 = vmatprep.subr.mxu0 0.0
    %151 = vmatpush1.msra.mxu0 0.0
    %152 = vmatprep.subr.mxu0 0.0
    %153 = vmatpush1.msra.mxu0 0.0
    %154 = vmatprep.subr.mxu0 0.0
    %155 = vmatpush1.msra.mxu0 0.0
    %156 = vmatprep.subr.mxu0 0.0
    %157 = vmatpush1.msra.mxu0 0.0
    %158 = vmatprep.subr.mxu0 0.0
    %159 = vmatpush1.msra.mxu0 0.0
    %160 = vmatprep.subr.mxu0 0.0
    %161 = vmatpush1.msra.mxu0 0.0
    %162 = vmatprep.subr.mxu0 0.0
    %163 = vmatpush1.msra.mxu0 0.0
    %164 = vmatprep.mubr.f32.mxu0 0.0
    %165 = vmatmul.mubr.f32.gmra.mrb[0].mxu0 %v98
    %v166 = vpop.f32.mrb[0].mxu0
    %v167 = vadd.f32 %v95, %v166
    %v168 = vpop.f32.mrb[0].mxu0
    %169 = vdwg.mxu0
    %v170 = vmax.f32 %v167, 0.0
    %vm171 = vcmask 261120
    %v172 = vsel %vm171, %v170, 0.0
    %v173 = vrot.slane %v172, 4
    %v174 = vadd.f32 %v172, %v173
    %v175 = vrot.slane %v174, 2
    %v176 = vadd.f32 %v174, %v175
    %v177 = vrot.slane %v176, 1
    %v178 = vadd.f32 %v176, %v177
    %v179 = vmul.f32 %v178, 0.125
    %v180 = vmul.f32 %v170, %v170
    %v181 = vsel %vm171, %v180, 0.0
    %v182 = vrot.slane %v181, 4
    %v183 = vadd.f32 %v181, %v182
    %v184 = vrot.slane %v183, 2
    %v185 = vadd.f32 %v183, %v184
    %v186 = vrot.slane %v185, 1
    %v187 = vadd.f32 %v185, %v186
    %v188 = vmul.f32 %v187, 0.125
    %v189 = vmul.f32 %v179, %v179
    %v190 = vsub.f32 %v188, %v189
    %v191 = vmax.f32 %v190, 0.0
    %v192 = vadd.f32 %v191, 1e-05
    %v193 = vrsqrt.pop %v192
    %v194 = vmul.f32 %v85, %v193
    %v195 = vmul.f32 %v179, %v194
    %v196 = vsub.f32 %v86, %v195
    %v197 = vlaneseq
    %v198 = vshrl.u32 %v197, 7
    %v199 = vsub.s32 0, %v198
    %v200 = vrot.slane %v194, %v199
    %v201 = vmul.f32 %v170, %v200
    %v202 = vlaneseq
    %v203 = vshrl.u32 %v202, 7
    %v204 = vsub.s32 0, %v203
    %v205 = vrot.slane %v196, %v204
    %v206 = vadd.f32 %v201, %v205
    %v207 = vld [vmem:[#allocation6] sm:$0xff]
    %v208 = vld [vmem:[#allocation6 + $0x8] sm:$0xff]
    %v209 = vld [vmem:[#allocation6 + $0x10] sm:$0xff]
    %v210 = vld [vmem:[#allocation6 + $0x18] sm:$0xff]
    %v211 = vlaneseq
    %v212 = vshrl.u32 %v211, 7
    %v213 = vsub.s32 0, %v212
    %v214 = vrot.slane %v87, %v213
    %v216 = vsel %vm171, %v206, 0
    %218 = vmatprep.subr.mxu0 0.0
    %219 = vmatpush1.msra.mxu0 %v207
    %220 = vmatprep.subr.mxu0 0.0
    %221 = vmatpush1.msra.mxu0 %v208
    %222 = vmatprep.subr.mxu0 0.0
    %223 = vmatpush1.msra.mxu0 %v209
    %224 = vmatprep.subr.mxu0 0.0
    %225 = vmatpush1.msra.mxu0 %v210
    %226 = vmatprep.subr.mxu0 0.0
    %227 = vmatpush1.msra.mxu0 0.0
    %228 = vmatprep.subr.mxu0 0.0
    %229 = vmatpush1.msra.mxu0 0.0
    %230 = vmatprep.subr.mxu0 0.0
    %231 = vmatpush1.msra.mxu0 0.0
    %232 = vmatprep.subr.mxu0 0.0
    %233 = vmatpush1.msra.mxu0 0.0
    %234 = vmatprep.subr.mxu0 0.0
    %235 = vmatpush1.msra.mxu0 0.0
    %236 = vmatprep.subr.mxu0 0.0
    %237 = vmatpush1.msra.mxu0 0.0
    %238 = vmatprep.subr.mxu0 0.0
    %239 = vmatpush1.msra.mxu0 0.0
    %240 = vmatprep.subr.mxu0 0.0
    %241 = vmatpush1.msra.mxu0 0.0
    %242 = vmatprep.subr.mxu0 0.0
    %243 = vmatpush1.msra.mxu0 0.0
    %244 = vmatprep.subr.mxu0 0.0
    %245 = vmatpush1.msra.mxu0 0.0
    %246 = vmatprep.subr.mxu0 0.0
    %247 = vmatpush1.msra.mxu0 0.0
    %248 = vmatprep.subr.mxu0 0.0
    %249 = vmatpush1.msra.mxu0 0.0
    %250 = vmatprep.subr.mxu0 0.0
    %251 = vmatpush1.msra.mxu0 0.0
    %252 = vmatprep.subr.mxu0 0.0
    %253 = vmatpush1.msra.mxu0 0.0
    %254 = vmatprep.subr.mxu0 0.0
    %255 = vmatpush1.msra.mxu0 0.0
    %256 = vmatprep.subr.mxu0 0.0
    %257 = vmatpush1.msra.mxu0 0.0
    %258 = vmatprep.subr.mxu0 0.0
    %259 = vmatpush1.msra.mxu0 0.0
    %260 = vmatprep.subr.mxu0 0.0
    %261 = vmatpush1.msra.mxu0 0.0
    %262 = vmatprep.subr.mxu0 0.0
    %263 = vmatpush1.msra.mxu0 0.0
    %264 = vmatprep.subr.mxu0 0.0
    %265 = vmatpush1.msra.mxu0 0.0
    %266 = vmatprep.subr.mxu0 0.0
    %267 = vmatpush1.msra.mxu0 0.0
    %268 = vmatprep.subr.mxu0 0.0
    %269 = vmatpush1.msra.mxu0 0.0
    %270 = vmatprep.subr.mxu0 0.0
    %271 = vmatpush1.msra.mxu0 0.0
    %272 = vmatprep.subr.mxu0 0.0
    %273 = vmatpush1.msra.mxu0 0.0
    %274 = vmatprep.subr.mxu0 0.0
    %275 = vmatpush1.msra.mxu0 0.0
    %276 = vmatprep.subr.mxu0 0.0
    %277 = vmatpush1.msra.mxu0 0.0
    %278 = vmatprep.subr.mxu0 0.0
    %279 = vmatpush1.msra.mxu0 0.0
    %280 = vmatprep.subr.mxu0 0.0
    %281 = vmatpush1.msra.mxu0 0.0
    %282 = vmatprep.mubr.f32.mxu0 0.0
    %283 = vmatmul.mubr.f32.gmra.mrb[0].mxu0 %v216
    %v284 = vpop.f32.mrb[0].mxu0
    %v285 = vadd.f32 %v214, %v284
    %v286 = vpop.f32.mrb[0].mxu0
    %287 = vdwg.mxu0
    %v288 = vmax.f32 %v285, 0.0
    %v289 = vld [vmem:[#allocation7] sm:$0xff]
    %v290 = vld [vmem:[#allocation7 + $0x8] sm:$0xff]
    %v291 = vld [vmem:[#allocation7 + $0x10] sm:$0xff]
    %v292 = vld [vmem:[#allocation7 + $0x18] sm:$0xff]
    %v293 = vlaneseq
    %v294 = vshrl.u32 %v293, 7
    %v295 = vsub.s32 0, %v294
    %v296 = vrot.slane %v88, %v295
    %v298 = vsel %vm171, %v288, 0
    %300 = vmatprep.subr.mxu0 0.0
    %301 = vmatpush1.msra.mxu0 %v289
    %302 = vmatprep.subr.mxu0 0.0
    %303 = vmatpush1.msra.mxu0 %v290
    %304 = vmatprep.subr.mxu0 0.0
    %305 = vmatpush1.msra.mxu0 %v291
    %306 = vmatprep.subr.mxu0 0.0
    %307 = vmatpush1.msra.mxu0 %v292
    %308 = vmatprep.subr.mxu0 0.0
    %309 = vmatpush1.msra.mxu0 0.0
    %310 = vmatprep.subr.mxu0 0.0
    %311 = vmatpush1.msra.mxu0 0.0
    %312 = vmatprep.subr.mxu0 0.0
    %313 = vmatpush1.msra.mxu0 0.0
    %314 = vmatprep.subr.mxu0 0.0
    %315 = vmatpush1.msra.mxu0 0.0
    %316 = vmatprep.subr.mxu0 0.0
    %317 = vmatpush1.msra.mxu0 0.0
    %318 = vmatprep.subr.mxu0 0.0
    %319 = vmatpush1.msra.mxu0 0.0
    %320 = vmatprep.subr.mxu0 0.0
    %321 = vmatpush1.msra.mxu0 0.0
    %322 = vmatprep.subr.mxu0 0.0
    %323 = vmatpush1.msra.mxu0 0.0
    %324 = vmatprep.subr.mxu0 0.0
    %325 = vmatpush1.msra.mxu0 0.0
    %326 = vmatprep.subr.mxu0 0.0
    %327 = vmatpush1.msra.mxu0 0.0
    %328 = vmatprep.subr.mxu0 0.0
    %329 = vmatpush1.msra.mxu0 0.0
    %330 = vmatprep.subr.mxu0 0.0
    %331 = vmatpush1.msra.mxu0 0.0
    %332 = vmatprep.subr.mxu0 0.0
    %333 = vmatpush1.msra.mxu0 0.0
    %334 = vmatprep.subr.mxu0 0.0
    %335 = vmatpush1.msra.mxu0 0.0
    %336 = vmatprep.subr.mxu0 0.0
    %337 = vmatpush1.msra.mxu0 0.0
    %338 = vmatprep.subr.mxu0 0.0
    %339 = vmatpush1.msra.mxu0 0.0
    %340 = vmatprep.subr.mxu0 0.0
    %341 = vmatpush1.msra.mxu0 0.0
    %342 = vmatprep.subr.mxu0 0.0
    %343 = vmatpush1.msra.mxu0 0.0
    %344 = vmatprep.subr.mxu0 0.0
    %345 = vmatpush1.msra.mxu0 0.0
    %346 = vmatprep.subr.mxu0 0.0
    %347 = vmatpush1.msra.mxu0 0.0
    %348 = vmatprep.subr.mxu0 0.0
    %349 = vmatpush1.msra.mxu0 0.0
    %350 = vmatprep.subr.mxu0 0.0
    %351 = vmatpush1.msra.mxu0 0.0
    %352 = vmatprep.subr.mxu0 0.0
    %353 = vmatpush1.msra.mxu0 0.0
    %354 = vmatprep.subr.mxu0 0.0
    %355 = vmatpush1.msra.mxu0 0.0
    %356 = vmatprep.subr.mxu0 0.0
    %357 = vmatpush1.msra.mxu0 0.0
    %358 = vmatprep.subr.mxu0 0.0
    %359 = vmatpush1.msra.mxu0 0.0
    %360 = vmatprep.subr.mxu0 0.0
    %361 = vmatpush1.msra.mxu0 0.0
    %362 = vmatprep.subr.mxu0 0.0
    %363 = vmatpush1.msra.mxu0 0.0
    %364 = vmatprep.mubr.f32.mxu0 0.0
    %365 = vmatmul.mubr.f32.gmra.mrb[0].mxu0 %v298
    %v366 = vpop.f32.mrb[0].mxu0
    %v367 = vadd.f32 %v296, %v366
    %v368 = vpop.f32.mrb[0].mxu0
    %369 = vdwg.mxu0
    %v370 = vmax.f32 %v367, 0.0
    %371 = vst [vmem:[%s5] sm:$0xff] %v370
    // Predicated region
    $region42: #{actor_forward.1} parent=1 // pred_check
      _
    $region43: #{actor_forward.1} parent=1 // pred_check_branch
      %373 = sbr.rel (0) target = $region45
    $region44: #{actor_forward.1} parent=1 // pred_region
      _
    $region45: #{actor_forward.1} parent=1 // pred_fallthru
      _
    // Predicated region
    $region46: #{actor_forward.1} parent=1 // pred_check
      _
    $region47: #{actor_forward.1} parent=1 // pred_check_branch
      %375 = sbr.rel (0) target = $region49
    $region48: #{actor_forward.1} parent=1 // pred_region
      _
    $region49: #{actor_forward.1} parent=1 // pred_fallthru
      _
    %376 = vsyncpa [#allocation3], 1
    %377 = vsyncpa [#allocation5], 1
    %378 = vsyncpa [#allocation8], 1

</llo_original>
